<compile_context>
chip_gen: v7x
topology: tpu7x:2x2x1
jax: 0.10.0
libtpu: 0.0.40
codegen_flags: <defaults>
</compile_context>

<pallas_src>
import jax
import jax.numpy as jnp
from jax.experimental import pallas as pl
from jax.experimental.pallas import tpu as pltpu


def _round_up(n, m):
    return ((n + m - 1) // m) * m


def _sublane(dtype):
    # Sublane packing multiple: 8 rows for 4-byte dtypes, 16 for 2-byte, 32 for 1-byte.
    return max(8, 32 // jnp.dtype(dtype).itemsize)


def autoencoder_kernel(x_ref, w_enc_ref, b_enc_ref, w_dec_ref, b_dec_ref, out_ref):
    # Encoder: h = relu(x @ W_enc + b_enc)   (MXU matmul, f32 accumulate; ReLU on VPU)
    h = jnp.dot(x_ref[...], w_enc_ref[...], preferred_element_type=jnp.float32)
    h = jnp.maximum(h + b_enc_ref[...], 0.0)           # b_enc is [1, H_pad] f32, broadcast

    # Decoder: y = sigmoid(h @ W_dec + b_dec)           (sigmoid exp rides the EUP slot)
    y = jnp.dot(h.astype(w_dec_ref.dtype), w_dec_ref[...],
                preferred_element_type=jnp.float32)
    out_ref[...] = jax.nn.sigmoid(y + b_dec_ref[...]).astype(out_ref.dtype)


def autoencoder_forward(x, w_enc, b_enc, w_dec, b_dec, *, block_rows=1024, dtype=None):
    """x: [B, D_in].  Returns decoded [B, D_in].

    `dtype` selects the activation/weight dtype inside the kernel (e.g.
    jnp.bfloat16 to halve HBM traffic); biases and MXU accumulation stay f32.
    Defaults to x.dtype.
    """
    B, D_in = x.shape
    H = w_enc.shape[1]
    assert w_enc.shape == (D_in, H)
    assert b_enc.shape == (H,)
    assert w_dec.shape == (H, D_in)
    assert b_dec.shape == (D_in,)

    dtype = jnp.dtype(dtype) if dtype is not None else jnp.dtype(x.dtype)
    itemsize = dtype.itemsize
    sub = _sublane(dtype)

    # Hidden dim lives only in VMEM (weights + intermediate h), so padding it
    # to a lane-dense multiple of 128 costs zero per-step HBM traffic.
    # Zero-padded columns/rows contribute exactly 0 to the decoder matmul.
    H_pad = _round_up(max(H, 128), 128)

    # Batch tile: multiple of the dtype sublane count, large enough to
    # amortize per-grid-step overhead, but small enough that the grid has
    # >=2 steps whenever B allows (so both v7x TensorCores get work).
    tb_cap = min(block_rows, _round_up(B, sub))
    tb_split = _round_up(pl.cdiv(B, 2), sub)
    TB = max(sub, min(tb_cap, tb_split))
    grid = (pl.cdiv(B, TB),)

    # Weights / biases: small, padded once on the hidden dim; stay VMEM-resident.
    x_in = x.astype(dtype)                                           # no-op if already `dtype`
    w_enc_p = jnp.pad(w_enc.astype(dtype), ((0, 0), (0, H_pad - H)))
    w_dec_p = jnp.pad(w_dec.astype(dtype), ((0, H_pad - H), (0, 0)))
    b_enc_p = jnp.pad(b_enc.astype(jnp.float32), (0, H_pad - H)).reshape(1, H_pad)
    b_dec_p = b_dec.astype(jnp.float32).reshape(1, D_in)

    # VMEM budget: double-buffered x/out tiles, single-buffered weights/biases,
    # f32 intermediates h and y.
    vmem_bytes = (
        2 * TB * D_in * itemsize                      # x tile (double-buffered)
        + 2 * TB * D_in * itemsize                    # out tile (double-buffered)
        + 2 * D_in * H_pad * itemsize                 # W_enc + W_dec (single-buffered)
        + (H_pad + D_in) * 4                          # biases
        + TB * (H_pad + D_in) * 4                     # f32 h / y intermediates
    )
    try:
        vmem_cap = int(pltpu.get_tpu_info().vmem_capacity_bytes)
    except Exception:
        vmem_cap = 64 << 20                           # conservative fallback (v7x)
    vmem_limit = int(min(max(2 * vmem_bytes + (2 << 20), 16 << 20),
                         int(vmem_cap * 0.8)))

    cost = pl.CostEstimate(
        flops=4 * B * D_in * H_pad,                   # two matmuls
        transcendentals=B * D_in,                     # ~1 exp per output element (advisory)
        bytes_accessed=(2 * B * D_in + 2 * D_in * H_pad) * itemsize
                       + (H_pad + D_in) * 4,
    )

    resident = dict(pipeline_mode=pl.Buffered(1))     # constant index_map -> 1 buffer

    out = pl.pallas_call(
        autoencoder_kernel,
        out_shape=jax.ShapeDtypeStruct((B, D_in), dtype),
        grid=grid,
        in_specs=[
            pl.BlockSpec((TB, D_in), lambda i: (i, 0)),               # x: tiled over batch
            pl.BlockSpec((D_in, H_pad), lambda i: (0, 0), **resident),  # W_enc: resident
            pl.BlockSpec((1, H_pad), lambda i: (0, 0), **resident),     # b_enc: resident
            pl.BlockSpec((H_pad, D_in), lambda i: (0, 0), **resident),  # W_dec: resident
            pl.BlockSpec((1, D_in), lambda i: (0, 0), **resident),      # b_dec: resident
        ],
        out_specs=pl.BlockSpec((TB, D_in), lambda i: (i, 0)),
        compiler_params=pltpu.CompilerParams(
            dimension_semantics=("parallel",),
            vmem_limit_bytes=vmem_limit,
        ),
        cost_estimate=cost,
    )(x_in, w_enc_p, b_enc_p, w_dec_p, b_dec_p)

    return out


def reference_forward(x, w_enc, b_enc, w_dec, b_dec):
    h = jnp.maximum(x @ w_enc + b_enc, 0.0)
    return jax.nn.sigmoid(h @ w_dec + b_dec)


if __name__ == "__main__":
    # Small shapes consistent with an MLP autoencoder forward.
    B, D_IN, H = 8, 64, 32

    key = jax.random.PRNGKey(0)
    k_x, k_we, k_be, k_wd, k_bd = jax.random.split(key, 5)

    # Deterministic parameter init (uniform, torch.nn.Linear-style scale).
    x = jax.random.normal(k_x, (B, D_IN), dtype=jnp.float32)
    lim_e = 1.0 / jnp.sqrt(D_IN)
    lim_d = 1.0 / jnp.sqrt(H)
    w_enc = jax.random.uniform(k_we, (D_IN, H), jnp.float32, -lim_e, lim_e)
    b_enc = jax.random.uniform(k_be, (H,), jnp.float32, -lim_e, lim_e)
    w_dec = jax.random.uniform(k_wd, (H, D_IN), jnp.float32, -lim_d, lim_d)
    b_dec = jax.random.uniform(k_bd, (D_IN,), jnp.float32, -lim_d, lim_d)

    out = jax.jit(autoencoder_forward)(x, w_enc, b_enc, w_dec, b_dec)
    out = jax.block_until_ready(out)

    ref = reference_forward(x, w_enc, b_enc, w_dec, b_dec)
    assert out.shape == (B, D_IN)
    assert jnp.allclose(out, ref, atol=1e-5, rtol=1e-5)

    print("KERNEL_OK")
</pallas_src>

<mosaic_0001>
module attributes {stable_mosaic.version = 11 : i64} {
  func.func @autoencoder_kernel(%arg0: i32, %arg1: memref<8x64xf32, #tpu.memory_space<vmem>>, %arg2: memref<64x128xf32, #tpu.memory_space<vmem>>, %arg3: memref<1x128xf32, #tpu.memory_space<vmem>>, %arg4: memref<128x64xf32, #tpu.memory_space<vmem>>, %arg5: memref<1x64xf32, #tpu.memory_space<vmem>>, %arg6: memref<8x64xf32, #tpu.memory_space<vmem>>) attributes {dimension_semantics = [#tpu.dimension_semantics<parallel>], iteration_bounds = array<i64: 1>, scalar_prefetch = 0 : i64, scratch_operands = 0 : i64, tpu.core_type = #tpu.core_type<tc>, window_params = [{transform_indices = @transform_0, window_bounds = array<i64: 8, 64>}, {pipeline_mode = #tpu.pipeline_mode<synchronous>, transform_indices = @transform_1, window_bounds = array<i64: 64, 128>}, {pipeline_mode = #tpu.pipeline_mode<synchronous>, transform_indices = @transform_2, window_bounds = array<i64: 1, 128>}, {pipeline_mode = #tpu.pipeline_mode<synchronous>, transform_indices = @transform_3, window_bounds = array<i64: 128, 64>}, {pipeline_mode = #tpu.pipeline_mode<synchronous>, transform_indices = @transform_4, window_bounds = array<i64: 1, 64>}, {transform_indices = @transform_5, window_bounds = array<i64: 8, 64>}]} {
    %c0 = arith.constant 0 : index
    %c0_0 = arith.constant 0 : index
    %0 = vector.load %arg1[%c0, %c0_0] : memref<8x64xf32, #tpu.memory_space<vmem>>, vector<8x64xf32>
    %c0_1 = arith.constant 0 : index
    %c0_2 = arith.constant 0 : index
    %1 = vector.load %arg2[%c0_1, %c0_2] : memref<64x128xf32, #tpu.memory_space<vmem>>, vector<64x128xf32>
    %cst = arith.constant dense<0.000000e+00> : vector<8x128xf32>
    %2 = tpu.matmul %0, %1, %cst {dimension_numbers = #tpu.dot_dimension_numbers<[1], [0], [0], [1], [0, 0, 1, 1], [], []>} : vector<8x64xf32>, vector<64x128xf32>, vector<8x128xf32> -> vector<8x128xf32>
    %c0_3 = arith.constant 0 : index
    %c0_4 = arith.constant 0 : index
    %3 = vector.load %arg3[%c0_3, %c0_4] : memref<1x128xf32, #tpu.memory_space<vmem>>, vector<1x128xf32>
    %4 = vector.broadcast %3 : vector<1x128xf32> to vector<8x128xf32>
    %5 = arith.addf %2, %4 : vector<8x128xf32>
    %cst_5 = arith.constant 0.000000e+00 : f32
    %6 = vector.broadcast %cst_5 : f32 to vector<8x128xf32>
    %7 = arith.maximumf %5, %6 : vector<8x128xf32>
    %c0_6 = arith.constant 0 : index
    %c0_7 = arith.constant 0 : index
    %8 = vector.load %arg4[%c0_6, %c0_7] : memref<128x64xf32, #tpu.memory_space<vmem>>, vector<128x64xf32>
    %cst_8 = arith.constant dense<0.000000e+00> : vector<8x64xf32>
    %9 = tpu.matmul %7, %8, %cst_8 {dimension_numbers = #tpu.dot_dimension_numbers<[1], [0], [0], [1], [0, 0, 1, 1], [], []>} : vector<8x128xf32>, vector<128x64xf32>, vector<8x64xf32> -> vector<8x64xf32>
    %c0_9 = arith.constant 0 : index
    %c0_10 = arith.constant 0 : index
    %10 = vector.load %arg5[%c0_9, %c0_10] : memref<1x64xf32, #tpu.memory_space<vmem>>, vector<1x64xf32>
    %11 = vector.broadcast %10 : vector<1x64xf32> to vector<8x64xf32>
    %12 = arith.addf %9, %11 : vector<8x64xf32>
    %13 = arith.negf %12 : vector<8x64xf32>
    %14 = math.exp %13 : vector<8x64xf32>
    %cst_11 = arith.constant 1.000000e+00 : f32
    %15 = vector.broadcast %cst_11 : f32 to vector<8x64xf32>
    %16 = arith.addf %15, %14 : vector<8x64xf32>
    %17 = arith.divf %15, %16 : vector<8x64xf32>
    %c0_12 = arith.constant 0 : index
    %c0_13 = arith.constant 0 : index
    %18 = vector.load %arg6[%c0_12, %c0_13] : memref<8x64xf32, #tpu.memory_space<vmem>>, vector<8x64xf32>
    tpu.vector_store %arg6[%c0_12, %c0_13], %17 {strides = array<i32>} : memref<8x64xf32, #tpu.memory_space<vmem>>, vector<8x64xf32>,
    return
  }
  func.func @transform_0(%arg0: i32) -> (i32, i32) {
    %c0_i32 = arith.constant 0 : i32
    %c0_i32_0 = arith.constant 0 : i32
    return %arg0, %c0_i32 : i32, i32
  }
  func.func @transform_1(%arg0: i32) -> (i32, i32) {
    %c0_i32 = arith.constant 0 : i32
    %c0_i32_0 = arith.constant 0 : i32
    %c0_i32_1 = arith.constant 0 : i32
    return %c0_i32, %c0_i32_0 : i32, i32
  }
  func.func @transform_2(%arg0: i32) -> (i32, i32) {
    %c0_i32 = arith.constant 0 : i32
    %c0_i32_0 = arith.constant 0 : i32
    %c0_i32_1 = arith.constant 0 : i32
    return %c0_i32, %c0_i32_0 : i32, i32
  }
  func.func @transform_3(%arg0: i32) -> (i32, i32) {
    %c0_i32 = arith.constant 0 : i32
    %c0_i32_0 = arith.constant 0 : i32
    %c0_i32_1 = arith.constant 0 : i32
    return %c0_i32, %c0_i32_0 : i32, i32
  }
  func.func @transform_4(%arg0: i32) -> (i32, i32) {
    %c0_i32 = arith.constant 0 : i32
    %c0_i32_0 = arith.constant 0 : i32
    %c0_i32_1 = arith.constant 0 : i32
    return %c0_i32, %c0_i32_0 : i32, i32
  }
  func.func @transform_5(%arg0: i32) -> (i32, i32) {
    %c0_i32 = arith.constant 0 : i32
    %c0_i32_0 = arith.constant 0 : i32
    return %arg0, %c0_i32 : i32, i32
  }
}

</mosaic_0001>

<llo_original>
// kernel: autoencoder_forward.1
$region0: #{autoencoder_forward.1}
  #allocation0 [shape = 'u32[]', space=smem, size = 0x4, offset = 0x4, fixed_abs, tag = 'smem constant byte address 0x4 - core index']
  #allocation1 [shape = 'u32[144,128]{1,0:T(1,128)}', space=vmem, size = 0x12000, scoped, tag = 'internal scratch']
  %s0 = inlined_call_operand.vmem [shape: f32[8,64], index: 0, kind: input, shape index: {}]
  %s1 = inlined_call_operand.vmem [shape: f32[64,128], index: 1, kind: input, shape index: {}]
  %s2 = inlined_call_operand.vmem [shape: f32[1,128], index: 2, kind: input, shape index: {}]
  %s3 = inlined_call_operand.vmem [shape: f32[128,64], index: 3, kind: input, shape index: {}]
  %s4 = inlined_call_operand.vmem [shape: f32[1,64], index: 4, kind: input, shape index: {}]
  %s5 = inlined_call_operand.hbm [shape: f32[8,64], index: 5, kind: output, shape index: {}]
  %s6 = sld [smem:[#allocation0]]
  $region30: #{autoencoder_forward.1} parent=0
    _
  %s8 = ssub.s32 1, %s6
  %s9 = scalar_select 0, %s8, %s6
  $region1: #{autoencoder_forward.1} parent=0
    #allocation2 [shape = 'u8[4096]{0}', space=vmem, size = 0x1000, scoped, tag = 'output window, operand 0, single buffered']
    #allocation3 [shape = 's32[1]{0}', space=sflag, size = 0x4, scoped, tag = 'scoped memory for autoencoder_forward.1']
    %10 = vsyncpa [#allocation3], 0
    // Predicated region
    $region2: #{autoencoder_forward.1} parent=1 // pred_check
      _
    $region3: #{autoencoder_forward.1} parent=1 // pred_check_branch
      %12 = sbr.rel (0) target = $region5
    $region4: #{autoencoder_forward.1} parent=1 // pred_region
      _
    $region5: #{autoencoder_forward.1} parent=1 // pred_fallthru
      _
    // Predicated region
    $region6: #{autoencoder_forward.1} parent=1 // pred_check
      _
    $region7: #{autoencoder_forward.1} parent=1 // pred_check_branch
      %14 = sbr.rel (0) target = $region9
    $region8: #{autoencoder_forward.1} parent=1 // pred_region
      _
    $region9: #{autoencoder_forward.1} parent=1 // pred_fallthru
      _
    // Predicated region
    $region10: #{autoencoder_forward.1} parent=1 // pred_check
      _
    $region11: #{autoencoder_forward.1} parent=1 // pred_check_branch
      %16 = sbr.rel (0) target = $region13
    $region12: #{autoencoder_forward.1} parent=1 // pred_region
      _
    $region13: #{autoencoder_forward.1} parent=1 // pred_fallthru
      _
    // Predicated region
    $region14: #{autoencoder_forward.1} parent=1 // pred_check
      _
    $region15: #{autoencoder_forward.1} parent=1 // pred_check_branch
      %18 = sbr.rel (0) target = $region17
    $region16: #{autoencoder_forward.1} parent=1 // pred_region
      _
    $region17: #{autoencoder_forward.1} parent=1 // pred_fallthru
      _
    // Predicated region
    $region18: #{autoencoder_forward.1} parent=1 // pred_check
      _
    $region19: #{autoencoder_forward.1} parent=1 // pred_check_branch
      %20 = sbr.rel (0) target = $region21
    $region20: #{autoencoder_forward.1} parent=1 // pred_region
      _
    $region21: #{autoencoder_forward.1} parent=1 // pred_fallthru
      _
    %v21 = vld [vmem:[%s0] sm:$0xff]
    %v22 = vld [vmem:[%s1] sm:$0xff]
    %v23 = vld [vmem:[%s1 + $0x8] sm:$0xff]
    %v24 = vld [vmem:[%s1 + $0x10] sm:$0xff]
    %v25 = vld [vmem:[%s1 + $0x18] sm:$0xff]
    %v26 = vld [vmem:[%s1 + $0x20] sm:$0xff]
    %v27 = vld [vmem:[%s1 + $0x28] sm:$0xff]
    %v28 = vld [vmem:[%s1 + $0x30] sm:$0xff]
    %v29 = vld [vmem:[%s1 + $0x38] sm:$0xff]
    %v30 = vld [vmem:[%s2] sm:$0x1]
    %v32 = vlaneseq
    %v33 = vshrl.u32 %v32, 7
    %v34 = vsub.s32 0, %v33
    %v35 = vrot.slane %v30, %v34
    %vm37 = vcmask 523264
    %v39 = vsel %vm37, %v21, 0
    %41 = vmatprep.subr.mxu0 0.0
    %42 = vmatpush1.msra.mxu0 %v22
    %43 = vmatprep.subr.mxu0 0.0
    %44 = vmatpush1.msra.mxu0 %v23
    %45 = vmatprep.subr.mxu0 0.0
    %46 = vmatpush1.msra.mxu0 %v24
    %47 = vmatprep.subr.mxu0 0.0
    %48 = vmatpush1.msra.mxu0 %v25
    %49 = vmatprep.subr.mxu0 0.0
    %50 = vmatpush1.msra.mxu0 %v26
    %51 = vmatprep.subr.mxu0 0.0
    %52 = vmatpush1.msra.mxu0 %v27
    %53 = vmatprep.subr.mxu0 0.0
    %54 = vmatpush1.msra.mxu0 %v28
    %55 = vmatprep.subr.mxu0 0.0
    %56 = vmatpush1.msra.mxu0 %v29
    %57 = vmatprep.subr.mxu0 0.0
    %58 = vmatpush1.msra.mxu0 0.0
    %59 = vmatprep.subr.mxu0 0.0
    %60 = vmatpush1.msra.mxu0 0.0
    %61 = vmatprep.subr.mxu0 0.0
    %62 = vmatpush1.msra.mxu0 0.0
    %63 = vmatprep.subr.mxu0 0.0
    %64 = vmatpush1.msra.mxu0 0.0
    %65 = vmatprep.subr.mxu0 0.0
    %66 = vmatpush1.msra.mxu0 0.0
    %67 = vmatprep.subr.mxu0 0.0
    %68 = vmatpush1.msra.mxu0 0.0
    %69 = vmatprep.subr.mxu0 0.0
    %70 = vmatpush1.msra.mxu0 0.0
    %71 = vmatprep.subr.mxu0 0.0
    %72 = vmatpush1.msra.mxu0 0.0
    %73 = vmatprep.subr.mxu0 0.0
    %74 = vmatpush1.msra.mxu0 0.0
    %75 = vmatprep.subr.mxu0 0.0
    %76 = vmatpush1.msra.mxu0 0.0
    %77 = vmatprep.subr.mxu0 0.0
    %78 = vmatpush1.msra.mxu0 0.0
    %79 = vmatprep.subr.mxu0 0.0
    %80 = vmatpush1.msra.mxu0 0.0
    %81 = vmatprep.subr.mxu0 0.0
    %82 = vmatpush1.msra.mxu0 0.0
    %83 = vmatprep.subr.mxu0 0.0
    %84 = vmatpush1.msra.mxu0 0.0
    %85 = vmatprep.subr.mxu0 0.0
    %86 = vmatpush1.msra.mxu0 0.0
    %87 = vmatprep.subr.mxu0 0.0
    %88 = vmatpush1.msra.mxu0 0.0
    %89 = vmatprep.subr.mxu0 0.0
    %90 = vmatpush1.msra.mxu0 0.0
    %91 = vmatprep.subr.mxu0 0.0
    %92 = vmatpush1.msra.mxu0 0.0
    %93 = vmatprep.subr.mxu0 0.0
    %94 = vmatpush1.msra.mxu0 0.0
    %95 = vmatprep.subr.mxu0 0.0
    %96 = vmatpush1.msra.mxu0 0.0
    %97 = vmatprep.subr.mxu0 0.0
    %98 = vmatpush1.msra.mxu0 0.0
    %99 = vmatprep.subr.mxu0 0.0
    %100 = vmatpush1.msra.mxu0 0.0
    %101 = vmatprep.subr.mxu0 0.0
    %102 = vmatpush1.msra.mxu0 0.0
    %103 = vmatprep.subr.mxu0 0.0
    %104 = vmatpush1.msra.mxu0 0.0
    %105 = vmatprep.mubr.f32.mxu0 0.0
    %106 = vmatmul.mubr.f32.gmra.mrb[0].mxu0 %v39
    %v107 = vpop.f32.mrb[0].mxu0
    %v108 = vadd.f32 %v35, %v107
    %v109 = vpop.f32.mrb[0].mxu0
    %110 = vdwg.mxu0
    %v111 = vmax.f32 %v108, 0.0
    %v112 = vld [vmem:[%s3] sm:$0xff]
    %v113 = vld [vmem:[%s3 + $0x8] sm:$0xff]
    %v114 = vld [vmem:[%s3 + $0x10] sm:$0xff]
    %v115 = vld [vmem:[%s3 + $0x18] sm:$0xff]
    %v116 = vld [vmem:[%s3 + $0x20] sm:$0xff]
    %v117 = vld [vmem:[%s3 + $0x28] sm:$0xff]
    %v118 = vld [vmem:[%s3 + $0x30] sm:$0xff]
    %v119 = vld [vmem:[%s3 + $0x38] sm:$0xff]
    %v120 = vld [vmem:[%s3 + $0x40] sm:$0xff]
    %v121 = vld [vmem:[%s3 + $0x48] sm:$0xff]
    %v122 = vld [vmem:[%s3 + $0x50] sm:$0xff]
    %v123 = vld [vmem:[%s3 + $0x58] sm:$0xff]
    %v124 = vld [vmem:[%s3 + $0x60] sm:$0xff]
    %v125 = vld [vmem:[%s3 + $0x68] sm:$0xff]
    %v126 = vld [vmem:[%s3 + $0x70] sm:$0xff]
    %v127 = vld [vmem:[%s3 + $0x78] sm:$0xff]
    %v128 = vld [vmem:[%s4] sm:$0x1]
    %v130 = vlaneseq
    %v131 = vshrl.u32 %v130, 7
    %v132 = vsub.s32 0, %v131
    %v133 = vrot.slane %v128, %v132
    %135 = vmatprep.subr.mxu0 0.0
    %136 = vmatpush1.msra.mxu0 %v112
    %137 = vmatprep.subr.mxu0 0.0
    %138 = vmatpush1.msra.mxu0 %v113
    %139 = vmatprep.subr.mxu0 0.0
    %140 = vmatpush1.msra.mxu0 %v114
    %141 = vmatprep.subr.mxu0 0.0
    %142 = vmatpush1.msra.mxu0 %v115
    %143 = vmatprep.subr.mxu0 0.0
    %144 = vmatpush1.msra.mxu0 %v116
    %145 = vmatprep.subr.mxu0 0.0
    %146 = vmatpush1.msra.mxu0 %v117
    %147 = vmatprep.subr.mxu0 0.0
    %148 = vmatpush1.msra.mxu0 %v118
    %149 = vmatprep.subr.mxu0 0.0
    %150 = vmatpush1.msra.mxu0 %v119
    %151 = vmatprep.subr.mxu0 0.0
    %152 = vmatpush1.msra.mxu0 %v120
    %153 = vmatprep.subr.mxu0 0.0
    %154 = vmatpush1.msra.mxu0 %v121
    %155 = vmatprep.subr.mxu0 0.0
    %156 = vmatpush1.msra.mxu0 %v122
    %157 = vmatprep.subr.mxu0 0.0
    %158 = vmatpush1.msra.mxu0 %v123
    %159 = vmatprep.subr.mxu0 0.0
    %160 = vmatpush1.msra.mxu0 %v124
    %161 = vmatprep.subr.mxu0 0.0
    %162 = vmatpush1.msra.mxu0 %v125
    %163 = vmatprep.subr.mxu0 0.0
    %164 = vmatpush1.msra.mxu0 %v126
    %165 = vmatprep.subr.mxu0 0.0
    %166 = vmatpush1.msra.mxu0 %v127
    %167 = vmatprep.subr.mxu0 0.0
    %168 = vmatpush1.msra.mxu0 0.0
    %169 = vmatprep.subr.mxu0 0.0
    %170 = vmatpush1.msra.mxu0 0.0
    %171 = vmatprep.subr.mxu0 0.0
    %172 = vmatpush1.msra.mxu0 0.0
    %173 = vmatprep.subr.mxu0 0.0
    %174 = vmatpush1.msra.mxu0 0.0
    %175 = vmatprep.subr.mxu0 0.0
    %176 = vmatpush1.msra.mxu0 0.0
    %177 = vmatprep.subr.mxu0 0.0
    %178 = vmatpush1.msra.mxu0 0.0
    %179 = vmatprep.subr.mxu0 0.0
    %180 = vmatpush1.msra.mxu0 0.0
    %181 = vmatprep.subr.mxu0 0.0
    %182 = vmatpush1.msra.mxu0 0.0
    %183 = vmatprep.subr.mxu0 0.0
    %184 = vmatpush1.msra.mxu0 0.0
    %185 = vmatprep.subr.mxu0 0.0
    %186 = vmatpush1.msra.mxu0 0.0
    %187 = vmatprep.subr.mxu0 0.0
    %188 = vmatpush1.msra.mxu0 0.0
    %189 = vmatprep.subr.mxu0 0.0
    %190 = vmatpush1.msra.mxu0 0.0
    %191 = vmatprep.subr.mxu0 0.0
    %192 = vmatpush1.msra.mxu0 0.0
    %193 = vmatprep.subr.mxu0 0.0
    %194 = vmatpush1.msra.mxu0 0.0
    %195 = vmatprep.subr.mxu0 0.0
    %196 = vmatpush1.msra.mxu0 0.0
    %197 = vmatprep.subr.mxu0 0.0
    %198 = vmatpush1.msra.mxu0 0.0
    %199 = vmatprep.mubr.f32.mxu0 0.0
    %200 = vmatmul.mubr.f32.gmra.mrb[0].mxu0 %v111
    %v201 = vpop.f32.mrb[0].mxu0
    %v202 = vadd.f32 %v133, %v201
    %v203 = vpop.f32.mrb[0].mxu0
    %204 = vdwg.mxu0
    %v205 = vxor.u32 %v202, 2147483648
    %v206 = vmul.f32 %v205, 1.442695
    %v207 = vpow.pop %v206
    %v208 = vadd.f32 %v207, 1.0
    %v209 = vrcp.pop %v208
    %v210 = vmul.f32 1.0, %v209
    %211 = vst.msk [vmem:[#allocation2] sm:$0xff] %vm37, %v210
    // Predicated region
    $region22: #{autoencoder_forward.1} parent=1 // pred_check
      _
    $region23: #{autoencoder_forward.1} parent=1 // pred_check_branch
      %213 = sbr.rel (0) target = $region25
    $region24: #{autoencoder_forward.1} parent=1 // pred_region
      %s215 = ssub.s32 128, 128
      %216 = vsyncadd [#allocation3], %s215
      %s218 = sshll.u32 [#allocation2], 4
      %s219 = int_to_ptr.vmem [resolvable:$true] %s218
      %221 = dma.vmem_to_hbm [thread:$0]  %s219, 128, %s5, [#allocation3]
    $region25: #{autoencoder_forward.1} parent=1 // pred_fallthru
      _
    // Predicated region
    $region26: #{autoencoder_forward.1} parent=1 // pred_check
      _
    $region27: #{autoencoder_forward.1} parent=1 // pred_check_branch
      %223 = sbr.rel (0) target = $region29
    $region28: #{autoencoder_forward.1} parent=1 // pred_region
      %224 = dma.done [#allocation3], 128
    $region29: #{autoencoder_forward.1} parent=1 // pred_fallthru
      _
    %225 = vsyncpa [#allocation3], 1

</llo_original>
